<compile_context>
chip_gen: v7x
topology: tpu7x:2x2x1
jax: 0.10.0
libtpu: 0.0.40
codegen_flags: <defaults>
</compile_context>

<pallas_src>
import functools

import jax
import jax.numpy as jnp
from jax.experimental import pallas as pl
from jax.experimental.pallas import tpu as pltpu

_LANE = 128
_MASK_NEG = 1e30          # additive mask sentinel (fp32-safe; do NOT use -inf)


def _round_up(n, m):
    return ((n + m - 1) // m) * m


def _pad2d(a, rows, cols):
    return jnp.pad(a, ((0, rows - a.shape[0]), (0, cols - a.shape[1])))


def _vmem_limit_bytes():
    """Generation-aware VMEM budget (v7x has 64 MiB/TC, v5e/v6e 128 MiB)."""
    try:
        cap = int(pltpu.get_tpu_info().vmem_capacity_bytes)
    except Exception:
        cap = 64 * 1024 * 1024                      # conservative fallback (v7x)
    return min((cap * 3) // 4, 100 * 1024 * 1024)   # leave compiler headroom


def _choose_tile(n_p, target, *, want_two_dst_tiles=False):
    """Largest multiple of 128 that divides n_p and is <= target."""
    cap = min(target, n_p)
    if want_two_dst_tiles and n_p >= 2 * _LANE:
        cap = min(cap, n_p // 2)       # keep >=2 dst tiles so v7x's 2 TCs both work
    best = _LANE
    t = _LANE
    while t <= cap:
        if n_p % t == 0:
            best = t
        t += _LANE
    return best


# --------------------------- kernel 1: projection ----------------------------
def _gat_project_kernel(x_ref, w_ref, att_cat_ref, h_ref, a_ref):
    # bf16 MXU operands, f32 accumulation.
    h = jnp.dot(x_ref[...].astype(jnp.bfloat16), w_ref[...],
                preferred_element_type=jnp.float32)
    h_ref[...] = h.astype(h_ref.dtype)                       # bf16 activations
    # Fused attention projections, lane-dense (c_out x 128):
    # col 0 = <att_dst, h_i>, col 1 = <att_src, h_i>, rest zero.
    a_ref[...] = jnp.dot(h, att_cat_ref[...], preferred_element_type=jnp.float32)


def gat_project(x_p, w_bf16, att_cat, *, tq, vmem_limit):
    n_p, c_in = x_p.shape
    c_out = w_bf16.shape[1]
    return pl.pallas_call(
        _gat_project_kernel,
        out_shape=(jax.ShapeDtypeStruct((n_p, c_out), jnp.bfloat16),
                   jax.ShapeDtypeStruct((n_p, _LANE), jnp.float32)),
        grid_spec=pltpu.PrefetchScalarGridSpec(
            num_scalar_prefetch=0,
            grid=(n_p // tq,),
            in_specs=[pl.BlockSpec((tq, c_in), lambda i: (i, 0)),
                      pl.BlockSpec((c_in, c_out), lambda i: (0, 0)),
                      pl.BlockSpec((c_out, _LANE), lambda i: (0, 0))],
            out_specs=[pl.BlockSpec((tq, c_out), lambda i: (i, 0)),
                       pl.BlockSpec((tq, _LANE), lambda i: (i, 0))]),
        compiler_params=pltpu.CompilerParams(
            dimension_semantics=("parallel",),
            vmem_limit_bytes=vmem_limit),
    )(x_p, w_bf16, att_cat)


# ------------------- kernel 2: attention + aggregation -----------------------
def _gat_attention_kernel(counts_ref, a_dst_ref, a_src_ref, adj_ref, h_ref,
                          bias_ref, o_ref, m_sc, l_sc, acc_sc,
                          *, neg_slope, ts, h_resident):
    i = pl.program_id(0)
    k = pl.program_id(1)
    nk = pl.num_programs(1)

    @pl.when(k == 0)
    def _():
        m_sc[...] = jnp.full(m_sc.shape, -jnp.inf, jnp.float32)
        l_sc[...] = jnp.zeros(l_sc.shape, jnp.float32)
        acc_sc[...] = jnp.zeros(acc_sc.shape, jnp.float32)

    # Block-sparse skip: tile pairs with zero edges contribute exactly 0
    # (their entries would be exp(-1e30 - m) == 0 once the diagonal tile,
    #  which is never empty thanks to the padded-diagonal self-loops, sets m).
    @pl.when(counts_ref[i * nk + k] > 0)
    def _():
        # Edge logits for this (dst-tile, src-tile) block — all f32 on the VPU.
        e = a_dst_ref[...] + a_src_ref[...]                       # (TQ, TS)
        e = jnp.where(e > 0, e, jnp.float32(neg_slope) * e)       # LeakyReLU
        # Additive adjacency bias computed in-kernel from the int8 stream.
        e = e + (adj_ref[...].astype(jnp.float32) - 1.0) * jnp.float32(_MASK_NEG)

        # Online (flash-style) softmax accumulation over source tiles.
        m_prev = m_sc[...]
        m_new = jnp.maximum(m_prev, jnp.max(e, axis=-1, keepdims=True))
        scale = jnp.exp(m_prev - m_new)
        p = jnp.exp(e - m_new)
        l_sc[...] = scale * l_sc[...] + jnp.sum(p, axis=-1, keepdims=True)
        if h_resident:
            src0 = pl.multiple_of(k * ts, ts)
            h_blk = h_ref[pl.ds(src0, ts), :]
        else:
            h_blk = h_ref[...]
        acc_sc[...] = scale * acc_sc[...] + jnp.dot(
            p.astype(jnp.bfloat16), h_blk, preferred_element_type=jnp.float32)
        m_sc[...] = m_new

    @pl.when(k == nk - 1)
    def _():
        inv_l = pl.reciprocal(l_sc[...], approx=True)         # EUP, off the VALU path
        o_ref[...] = (acc_sc[...] * inv_l + bias_ref[...]).astype(o_ref.dtype)


def gat_aggregate(counts, a_dst, a_src_row, adj_i8, h_bf16, bias, *,
                  neg_slope, tq, ts, h_resident, vmem_limit):
    n_p = a_dst.shape[0]
    c_out = h_bf16.shape[1]
    kernel = functools.partial(_gat_attention_kernel, neg_slope=neg_slope,
                               ts=ts, h_resident=h_resident)
    if h_resident:
        # h stays in VMEM for the whole kernel (constant block index -> one DMA).
        h_spec = pl.BlockSpec((n_p, c_out), lambda i, k, c: (0, 0))
    else:
        h_spec = pl.BlockSpec((ts, c_out), lambda i, k, c: (k, 0))
    return pl.pallas_call(
        kernel,
        out_shape=jax.ShapeDtypeStruct((n_p, c_out), jnp.float32),
        grid_spec=pltpu.PrefetchScalarGridSpec(
            num_scalar_prefetch=1,                               # per-tile edge counts
            grid=(n_p // tq, n_p // ts),
            in_specs=[pl.BlockSpec((tq, 1), lambda i, k, c: (i, 0)),    # a_dst column
                      pl.BlockSpec((1, ts), lambda i, k, c: (0, k)),    # a_src row
                      pl.BlockSpec((tq, ts), lambda i, k, c: (i, k)),   # int8 adj tile
                      h_spec,                                           # h (bf16)
                      pl.BlockSpec((1, c_out), lambda i, k, c: (0, 0))],  # bias
            out_specs=pl.BlockSpec((tq, c_out), lambda i, k, c: (i, 0)),
            scratch_shapes=[pltpu.VMEM((tq, 1), jnp.float32),
                            pltpu.VMEM((tq, 1), jnp.float32),
                            pltpu.VMEM((tq, c_out), jnp.float32)]),
        compiler_params=pltpu.CompilerParams(
            dimension_semantics=("parallel", "arbitrary"),
            vmem_limit_bytes=vmem_limit),
    )(counts, a_dst, a_src_row, adj_i8, h_bf16, bias)


# ------------------------------ layer / forward -------------------------------
def gat_layer(x_p, w_bf16, att_cat, bias_p, adj_i8, counts, neg_slope,
              *, tq, ts, h_resident, vmem_limit):
    n_p = x_p.shape[0]
    h, a = gat_project(x_p, w_bf16, att_cat, tq=tq, vmem_limit=vmem_limit)
    a_dst = a[:, 0:1]                              # (Np, 1)
    a_src_row = a[:, 1].reshape(1, n_p)            # (1, Np) layout plumbing
    return gat_aggregate(counts, a_dst, a_src_row, adj_i8, h, bias_p,
                         neg_slope=neg_slope, tq=tq, ts=ts,
                         h_resident=h_resident, vmem_limit=vmem_limit)


def pyg_gat_forward(x, adj, params, neg_slope, *, target_tile=512):
    """Two stacked GATConv layers (no nonlinearity in between, as in the
    reference module's forward).  `adj[dst, src] = 1` iff edge src->dst."""
    n, in_feats = x.shape
    n_hidden = params["w1"].shape[1]
    out_feats = params["w2"].shape[1]

    n_p = _round_up(n, _LANE)
    in_p = _round_up(in_feats, _LANE)
    hid_p = _round_up(n_hidden, _LANE)
    out_p = _round_up(out_feats, _LANE)

    vmem_limit = _vmem_limit_bytes()

    # Big attention tiles (target 512) to amortize per-grid-step overhead,
    # generation-aware via the VMEM budget; keep >=2 dst tiles for v7x.
    tq = _choose_tile(n_p, target_tile, want_two_dst_tiles=True)
    ts = _choose_tile(n_p, target_tile)

    # Keep h fully VMEM-resident during aggregation when it fits the budget.
    c_out_max = max(hid_p, out_p)
    h_resident = (n_p * c_out_max * 2) <= (vmem_limit // 4)

    x_p = _pad2d(x, n_p, in_p)
    adj_p = _pad2d(adj, n_p, n_p)
    idx = jnp.arange(n_p)
    adj_p = adj_p.at[idx, idx].set(1.0)   # self-loops on full padded diagonal (required)

    # Per-(dst-tile, src-tile) edge counts -> SMEM scalar prefetch (block skip).
    ndt, nst = n_p // tq, n_p // ts
    counts = adj_p.reshape(ndt, tq, nst, ts).sum(axis=(1, 3))
    counts = counts.reshape(-1).astype(jnp.int32)

    adj_i8 = adj_p.astype(jnp.int8)       # 4x smaller adjacency HBM stream

    def prep(w, att_src, att_dst, b, ci, co):
        w_p = _pad2d(w, ci, co).astype(jnp.bfloat16)
        att_cat = jnp.zeros((co, _LANE), jnp.float32)          # lane-dense att proj
        att_cat = att_cat.at[:, 0].set(_pad2d(att_dst, 1, co)[0])
        att_cat = att_cat.at[:, 1].set(_pad2d(att_src, 1, co)[0])
        b_p = _pad2d(b, 1, co)
        return w_p, att_cat, b_p

    w1, ac1, b1 = prep(params["w1"], params["as1"], params["ad1"], params["b1"],
                       in_p, hid_p)
    w2, ac2, b2 = prep(params["w2"], params["as2"], params["ad2"], params["b2"],
                       hid_p, out_p)

    h1 = gat_layer(x_p, w1, ac1, b1, adj_i8, counts, neg_slope,
                   tq=tq, ts=ts, h_resident=h_resident, vmem_limit=vmem_limit)
    h2 = gat_layer(h1, w2, ac2, b2, adj_i8, counts, neg_slope,
                   tq=tq, ts=ts, h_resident=h_resident, vmem_limit=vmem_limit)
    return h2[:n, :out_feats]


# ---------------- pure-JAX reference (for correctness check) ----------------
def _gat_layer_ref(x, w, att_src, att_dst, bias, adj, neg_slope):
    h = x @ w
    a_s = (h * att_src).sum(-1)
    a_d = (h * att_dst).sum(-1)
    e = a_d[:, None] + a_s[None, :]
    e = jnp.where(e > 0, e, neg_slope * e)
    e = jnp.where(adj > 0, e, -1e30)
    e = e - e.max(-1, keepdims=True)
    p = jnp.exp(e) * adj
    alpha = p / p.sum(-1, keepdims=True)
    return alpha @ h + bias


def pyg_gat_ref(x, adj, params, neg_slope):
    h = _gat_layer_ref(x, params["w1"], params["as1"], params["ad1"],
                       params["b1"], adj, neg_slope)
    return _gat_layer_ref(h, params["w2"], params["as2"], params["ad2"],
                          params["b2"], adj, neg_slope)


if __name__ == "__main__":
    N = 16            # number of nodes
    IN_FEATS = 8
    N_HIDDEN = 32
    OUT_FEATS = 8
    NEG_SLOPE = 0.2   # relu_l
    N_EDGES = 48

    key = jax.random.PRNGKey(0)
    (k_x, k_src, k_dst, k_w1, k_as1, k_ad1, k_b1,
     k_w2, k_as2, k_ad2, k_b2) = jax.random.split(key, 11)

    x = jax.random.normal(k_x, (N, IN_FEATS), dtype=jnp.float32)

    # Random edge_index [2, E]; dense adjacency adj[dst, src] with self-loops.
    src = jax.random.randint(k_src, (N_EDGES,), 0, N)
    dst = jax.random.randint(k_dst, (N_EDGES,), 0, N)
    adj = jnp.zeros((N, N), dtype=jnp.float32)
    adj = adj.at[dst, src].set(1.0)
    adj = adj.at[jnp.arange(N), jnp.arange(N)].set(1.0)

    # GATConv parameters (lin weights pre-transposed to [C_in, C_out];
    # att_* as [1, C_out]; bias as [1, C_out]).
    params = {
        "w1":  jax.random.normal(k_w1,  (IN_FEATS, N_HIDDEN),  jnp.float32) * 0.3,
        "as1": jax.random.normal(k_as1, (1, N_HIDDEN),         jnp.float32) * 0.3,
        "ad1": jax.random.normal(k_ad1, (1, N_HIDDEN),         jnp.float32) * 0.3,
        "b1":  jax.random.normal(k_b1,  (1, N_HIDDEN),         jnp.float32) * 0.1,
        "w2":  jax.random.normal(k_w2,  (N_HIDDEN, OUT_FEATS), jnp.float32) * 0.3,
        "as2": jax.random.normal(k_as2, (1, OUT_FEATS),        jnp.float32) * 0.3,
        "ad2": jax.random.normal(k_ad2, (1, OUT_FEATS),        jnp.float32) * 0.3,
        "b2":  jax.random.normal(k_b2,  (1, OUT_FEATS),        jnp.float32) * 0.1,
    }

    out = pyg_gat_forward(x, adj, params, NEG_SLOPE)
    out = jax.block_until_ready(out)

    ref = pyg_gat_ref(x, adj, params, NEG_SLOPE)
    assert out.shape == (N, OUT_FEATS)
    # tolerance covers bf16 MXU operands + the approximate EUP reciprocal
    assert jnp.allclose(out, ref, rtol=2e-2, atol=2e-2), "mismatch vs reference"

    print("KERNEL_OK")
</pallas_src>

<mosaic_0001>
module attributes {stable_mosaic.version = 11 : i64} {
  func.func @_gat_project_kernel(%arg0: i32, %arg1: memref<128x128xf32, #tpu.memory_space<vmem>>, %arg2: memref<128x128xbf16, #tpu.memory_space<vmem>>, %arg3: memref<128x128xf32, #tpu.memory_space<vmem>>, %arg4: memref<128x128xbf16, #tpu.memory_space<vmem>>, %arg5: memref<128x128xf32, #tpu.memory_space<vmem>>) attributes {dimension_semantics = [#tpu.dimension_semantics<parallel>], iteration_bounds = array<i64: 1>, scalar_prefetch = 0 : i64, scratch_operands = 0 : i64, tpu.core_type = #tpu.core_type<tc>, window_params = [{transform_indices = @transform_0, window_bounds = array<i64: 128, 128>}, {pipeline_mode = #tpu.pipeline_mode<synchronous>, transform_indices = @transform_1, window_bounds = array<i64: 128, 128>}, {pipeline_mode = #tpu.pipeline_mode<synchronous>, transform_indices = @transform_2, window_bounds = array<i64: 128, 128>}, {transform_indices = @transform_3, window_bounds = array<i64: 128, 128>}, {transform_indices = @transform_4, window_bounds = array<i64: 128, 128>}]} {
    %c0 = arith.constant 0 : index
    %c0_0 = arith.constant 0 : index
    %0 = vector.load %arg1[%c0, %c0_0] : memref<128x128xf32, #tpu.memory_space<vmem>>, vector<128x128xf32>
    %1 = arith.truncf %0 : vector<128x128xf32> to vector<128x128xbf16>
    %c0_1 = arith.constant 0 : index
    %c0_2 = arith.constant 0 : index
    %2 = vector.load %arg2[%c0_1, %c0_2] : memref<128x128xbf16, #tpu.memory_space<vmem>>, vector<128x128xbf16>
    %cst = arith.constant dense<0.000000e+00> : vector<128x128xf32>
    %3 = tpu.matmul %1, %2, %cst {dimension_numbers = #tpu.dot_dimension_numbers<[1], [0], [0], [1], [0, 0, 1, 1], [], []>} : vector<128x128xbf16>, vector<128x128xbf16>, vector<128x128xf32> -> vector<128x128xf32>
    %4 = arith.truncf %3 : vector<128x128xf32> to vector<128x128xbf16>
    %c0_3 = arith.constant 0 : index
    %c0_4 = arith.constant 0 : index
    %5 = vector.load %arg4[%c0_3, %c0_4] : memref<128x128xbf16, #tpu.memory_space<vmem>>, vector<128x128xbf16>
    tpu.vector_store %arg4[%c0_3, %c0_4], %4 {strides = array<i32>} : memref<128x128xbf16, #tpu.memory_space<vmem>>, vector<128x128xbf16>,
    %c0_5 = arith.constant 0 : index
    %c0_6 = arith.constant 0 : index
    %6 = vector.load %arg3[%c0_5, %c0_6] : memref<128x128xf32, #tpu.memory_space<vmem>>, vector<128x128xf32>
    %cst_7 = arith.constant dense<0.000000e+00> : vector<128x128xf32>
    %7 = tpu.matmul %3, %6, %cst_7 {dimension_numbers = #tpu.dot_dimension_numbers<[1], [0], [0], [1], [0, 0, 1, 1], [], []>} : vector<128x128xf32>, vector<128x128xf32>, vector<128x128xf32> -> vector<128x128xf32>
    %c0_8 = arith.constant 0 : index
    %c0_9 = arith.constant 0 : index
    %8 = vector.load %arg5[%c0_8, %c0_9] : memref<128x128xf32, #tpu.memory_space<vmem>>, vector<128x128xf32>
    tpu.vector_store %arg5[%c0_8, %c0_9], %7 {strides = array<i32>} : memref<128x128xf32, #tpu.memory_space<vmem>>, vector<128x128xf32>,
    return
  }
  func.func @transform_0(%arg0: i32) -> (i32, i32) {
    %c0_i32 = arith.constant 0 : i32
    %c0_i32_0 = arith.constant 0 : i32
    return %arg0, %c0_i32 : i32, i32
  }
  func.func @transform_1(%arg0: i32) -> (i32, i32) {
    %c0_i32 = arith.constant 0 : i32
    %c0_i32_0 = arith.constant 0 : i32
    %c0_i32_1 = arith.constant 0 : i32
    return %c0_i32, %c0_i32_0 : i32, i32
  }
  func.func @transform_2(%arg0: i32) -> (i32, i32) {
    %c0_i32 = arith.constant 0 : i32
    %c0_i32_0 = arith.constant 0 : i32
    %c0_i32_1 = arith.constant 0 : i32
    return %c0_i32, %c0_i32_0 : i32, i32
  }
  func.func @transform_3(%arg0: i32) -> (i32, i32) {
    %c0_i32 = arith.constant 0 : i32
    %c0_i32_0 = arith.constant 0 : i32
    return %arg0, %c0_i32 : i32, i32
  }
  func.func @transform_4(%arg0: i32) -> (i32, i32) {
    %c0_i32 = arith.constant 0 : i32
    %c0_i32_0 = arith.constant 0 : i32
    return %arg0, %c0_i32 : i32, i32
  }
}

</mosaic_0001>

<llo_original>
// kernel: tpu_custom_call.1
$region0: #{tpu_custom_call.1}
  #allocation0 [shape = 'u32[]', space=smem, size = 0x4, offset = 0x4, fixed_abs, tag = 'smem constant byte address 0x4 - core index']
  #allocation1 [shape = 'u32[144,128]{1,0:T(1,128)}', space=vmem, size = 0x12000, scoped, tag = 'internal scratch']
  %s0 = inlined_call_operand.hbm [shape: f32[128,128], index: 0, kind: input, shape index: {}]
  %s1 = inlined_call_operand.hbm [shape: bf16[128,128], index: 1, kind: input, shape index: {}]
  %s2 = inlined_call_operand.hbm [shape: f32[128,128], index: 2, kind: input, shape index: {}]
  %s3 = inlined_call_operand.hbm [shape: bf16[128,128], index: 3, kind: output, shape index: {0}]
  %s4 = inlined_call_operand.hbm [shape: f32[128,128], index: 4, kind: output, shape index: {1}]
  %5 = xla_tuple %s3, %s4
  %s6 = sld [smem:[#allocation0]]
  $region42: #{tpu_custom_call.1} parent=0
    _
  %s8 = ssub.s32 1, %s6
  %s9 = scalar_select 0, %s8, %s6
  $region1: #{tpu_custom_call.1} parent=0
    #allocation2 [shape = 'u8[65536]{0}', space=vmem, size = 0x10000, scoped, tag = 'input window, operand 0, single buffered']
    #allocation3 [shape = 's32[1]{0}', space=sflag, size = 0x4, scoped, tag = 'scoped memory for tpu_custom_call.1']
    #allocation4 [shape = 's32[1]{0}', space=sflag, size = 0x4, scoped, tag = 'scoped memory for tpu_custom_call.1']
    #allocation5 [shape = 'u8[32768]{0}', space=vmem, size = 0x8000, scoped, tag = 'input window, operand 1, single buffered']
    #allocation6 [shape = 's32[1]{0}', space=sflag, size = 0x4, scoped, tag = 'scoped memory for tpu_custom_call.1']
    #allocation7 [shape = 'u8[65536]{0}', space=vmem, size = 0x10000, scoped, tag = 'input window, operand 2, single buffered']
    #allocation8 [shape = 'u8[32768]{0}', space=vmem, size = 0x8000, scoped, tag = 'output window, operand 0, single buffered']
    #allocation9 [shape = 'u8[65536]{0}', space=vmem, size = 0x10000, scoped, tag = 'output window, operand 1, single buffered']
    #allocation10 [shape = 's32[1]{0}', space=sflag, size = 0x4, scoped, tag = 'scoped memory for tpu_custom_call.1']
    %10 = vsyncpa [#allocation3], 0
    %11 = vsyncpa [#allocation6], 0
    %12 = vsyncpa [#allocation4], 0
    %13 = vsyncpa [#allocation10], 0
    // Predicated region
    $region2: #{tpu_custom_call.1} parent=1 // pred_check
      _
    $region3: #{tpu_custom_call.1} parent=1 // pred_check_branch
      %15 = sbr.rel (0) target = $region5
    $region4: #{tpu_custom_call.1} parent=1 // pred_region
      %s17 = ssub.s32 2048, 2048
      %18 = vsyncadd [#allocation3], %s17
      %s19 = sshll.u32 [#allocation2], 4
      %s20 = int_to_ptr.vmem [resolvable:$true] %s19
      %25 = dma.hbm_to_vmem [thread:$0]  %s0, 2048, %s20, [#allocation3], 128, 128, 8
    $region5: #{tpu_custom_call.1} parent=1 // pred_fallthru
      _
    // Predicated region
    $region6: #{tpu_custom_call.1} parent=1 // pred_check
      _
    $region7: #{tpu_custom_call.1} parent=1 // pred_check_branch
      %27 = sbr.rel (0) target = $region9
    $region8: #{tpu_custom_call.1} parent=1 // pred_region
      %s29 = ssub.s32 1024, 1024
      %30 = vsyncadd [#allocation6], %s29
      %s31 = sshll.u32 [#allocation5], 4
      %s32 = int_to_ptr.vmem [resolvable:$true] %s31
      %37 = dma.hbm_to_vmem [thread:$0]  %s1, 1024, %s32, [#allocation6], 64, 64, 4
    $region9: #{tpu_custom_call.1} parent=1 // pred_fallthru
      _
    // Predicated region
    $region10: #{tpu_custom_call.1} parent=1 // pred_check
      _
    $region11: #{tpu_custom_call.1} parent=1 // pred_check_branch
      %39 = sbr.rel (0) target = $region13
    $region12: #{tpu_custom_call.1} parent=1 // pred_region
      %s41 = ssub.s32 2048, 2048
      %42 = vsyncadd [#allocation6], %s41
      %s43 = sshll.u32 [#allocation7], 4
      %s44 = int_to_ptr.vmem [resolvable:$true] %s43
      %49 = dma.hbm_to_vmem [thread:$0]  %s2, 2048, %s44, [#allocation6], 128, 128, 8
    $region13: #{tpu_custom_call.1} parent=1 // pred_fallthru
      _
    // Predicated region
    $region14: #{tpu_custom_call.1} parent=1 // pred_check
      _
    $region15: #{tpu_custom_call.1} parent=1 // pred_check_branch
      %51 = sbr.rel (0) target = $region17
    $region16: #{tpu_custom_call.1} parent=1 // pred_region
      %52 = dma.done [#allocation3], 2048
    $region17: #{tpu_custom_call.1} parent=1 // pred_fallthru
      _
    // Predicated region
    $region18: #{tpu_custom_call.1} parent=1 // pred_check
      _
    $region19: #{tpu_custom_call.1} parent=1 // pred_check_branch
      %54 = sbr.rel (0) target = $region21
    $region20: #{tpu_custom_call.1} parent=1 // pred_region
      %55 = dma.done [#allocation6], 1024
    $region21: #{tpu_custom_call.1} parent=1 // pred_fallthru
      _
    // Predicated region
    $region22: #{tpu_custom_call.1} parent=1 // pred_check
      _
    $region23: #{tpu_custom_call.1} parent=1 // pred_check_branch
      %57 = sbr.rel (0) target = $region25
    $region24: #{tpu_custom_call.1} parent=1 // pred_region
      %58 = dma.done [#allocation6], 2048
    $region25: #{tpu_custom_call.1} parent=1 // pred_fallthru
      _
    %v60 = vld [vmem:[#allocation2] sm:$0xff]
    %v61 = vld [vmem:[#allocation2 + $0x8] sm:$0xff]
    %v62 = vld [vmem:[#allocation2 + $0x10] sm:$0xff]
    %v63 = vld [vmem:[#allocation2 + $0x18] sm:$0xff]
    %v64 = vld [vmem:[#allocation2 + $0x20] sm:$0xff]
    %v65 = vld [vmem:[#allocation2 + $0x28] sm:$0xff]
    %v66 = vld [vmem:[#allocation2 + $0x30] sm:$0xff]
    %v67 = vld [vmem:[#allocation2 + $0x38] sm:$0xff]
    %v68 = vld [vmem:[#allocation2 + $0x40] sm:$0xff]
    %v69 = vld [vmem:[#allocation2 + $0x48] sm:$0xff]
    %v70 = vld [vmem:[#allocation2 + $0x50] sm:$0xff]
    %v71 = vld [vmem:[#allocation2 + $0x58] sm:$0xff]
    %v72 = vld [vmem:[#allocation2 + $0x60] sm:$0xff]
    %v73 = vld [vmem:[#allocation2 + $0x68] sm:$0xff]
    %v74 = vld [vmem:[#allocation2 + $0x70] sm:$0xff]
    %v75 = vld [vmem:[#allocation2 + $0x78] sm:$0xff]
    %v76 = vpack.c.bf16 %v61, %v60
    %v77 = vpack.c.bf16 %v63, %v62
    %v78 = vpack.c.bf16 %v65, %v64
    %v79 = vpack.c.bf16 %v67, %v66
    %v80 = vpack.c.bf16 %v69, %v68
    %v81 = vpack.c.bf16 %v71, %v70
    %v82 = vpack.c.bf16 %v73, %v72
    %v83 = vpack.c.bf16 %v75, %v74
    %v84 = vld [vmem:[#allocation5] sm:$0xf]
    %v85 = vld [vmem:[#allocation5 + $0x4] sm:$0xf]
    %v86 = vld [vmem:[#allocation5 + $0x8] sm:$0xf]
    %v87 = vld [vmem:[#allocation5 + $0xc] sm:$0xf]
    %v88 = vld [vmem:[#allocation5 + $0x10] sm:$0xf]
    %v89 = vld [vmem:[#allocation5 + $0x14] sm:$0xf]
    %v90 = vld [vmem:[#allocation5 + $0x18] sm:$0xf]
    %v91 = vld [vmem:[#allocation5 + $0x1c] sm:$0xf]
    %v92 = vld [vmem:[#allocation5 + $0x20] sm:$0xf]
    %v93 = vld [vmem:[#allocation5 + $0x24] sm:$0xf]
    %v94 = vld [vmem:[#allocation5 + $0x28] sm:$0xf]
    %v95 = vld [vmem:[#allocation5 + $0x2c] sm:$0xf]
    %v96 = vld [vmem:[#allocation5 + $0x30] sm:$0xf]
    %v97 = vld [vmem:[#allocation5 + $0x34] sm:$0xf]
    %v98 = vld [vmem:[#allocation5 + $0x38] sm:$0xf]
    %v99 = vld [vmem:[#allocation5 + $0x3c] sm:$0xf]
    %v116 = vunpack.c.l.b16 %v84
    %v117 = vunpack.c.l.b16 %v85
    %v118 = vunpack.c.l.b16 %v86
    %v119 = vunpack.c.l.b16 %v87
    %v120 = vunpack.c.l.b16 %v88
    %v121 = vunpack.c.l.b16 %v89
    %v122 = vunpack.c.l.b16 %v90
    %v123 = vunpack.c.l.b16 %v91
    %v124 = vunpack.c.l.b16 %v92
    %v125 = vunpack.c.l.b16 %v93
    %v126 = vunpack.c.l.b16 %v94
    %v127 = vunpack.c.l.b16 %v95
    %v128 = vunpack.c.l.b16 %v96
    %v129 = vunpack.c.l.b16 %v97
    %v130 = vunpack.c.l.b16 %v98
    %v131 = vunpack.c.l.b16 %v99
    %v132 = vpack.c.b16 %v117, %v116
    %v133 = vpack.c.b16 %v119, %v118
    %v134 = vpack.c.b16 %v121, %v120
    %v135 = vpack.c.b16 %v123, %v122
    %v136 = vpack.c.b16 %v125, %v124
    %v137 = vpack.c.b16 %v127, %v126
    %v138 = vpack.c.b16 %v129, %v128
    %v139 = vpack.c.b16 %v131, %v130
    %148 = vmatprep.subr.bf16.mxu0 0
    %149 = vmatpush1.bf16.msra.mxu0 %v132
    %150 = vmatprep.subr.bf16.mxu0 0
    %151 = vmatpush1.bf16.msra.mxu0 %v133
    %152 = vmatprep.subr.bf16.mxu0 0
    %153 = vmatpush1.bf16.msra.mxu0 %v134
    %154 = vmatprep.subr.bf16.mxu0 0
    %155 = vmatpush1.bf16.msra.mxu0 %v135
    %156 = vmatprep.subr.bf16.mxu0 0
    %157 = vmatpush1.bf16.msra.mxu0 %v136
    %158 = vmatprep.subr.bf16.mxu0 0
    %159 = vmatpush1.bf16.msra.mxu0 %v137
    %160 = vmatprep.subr.bf16.mxu0 0
    %161 = vmatpush1.bf16.msra.mxu0 %v138
    %162 = vmatprep.subr.bf16.mxu0 0
    %163 = vmatpush1.bf16.msra.mxu0 %v139
    %164 = vmatprep.subr.bf16.mxu0 0
    %165 = vmatpush1.bf16.msra.mxu0 0
    %166 = vmatprep.subr.bf16.mxu0 0
    %167 = vmatpush1.bf16.msra.mxu0 0
    %168 = vmatprep.subr.bf16.mxu0 0
    %169 = vmatpush1.bf16.msra.mxu0 0
    %170 = vmatprep.subr.bf16.mxu0 0
    %171 = vmatpush1.bf16.msra.mxu0 0
    %172 = vmatprep.subr.bf16.mxu0 0
    %173 = vmatpush1.bf16.msra.mxu0 0
    %174 = vmatprep.subr.bf16.mxu0 0
    %175 = vmatpush1.bf16.msra.mxu0 0
    %176 = vmatprep.subr.bf16.mxu0 0
    %177 = vmatpush1.bf16.msra.mxu0 0
    %178 = vmatprep.subr.bf16.mxu0 0
    %179 = vmatpush1.bf16.msra.mxu0 0
    %180 = vmatprep.mubr.bf16.mxu0 0
    %181 = vmatmul.mubr.bf16.gmra.mrb[0].mxu0 %v76
    %v182 = vpop.f32.mrb[0].mxu0
    %v183 = vadd.f32 0.0, %v182
    %v184 = vpop.f32.mrb[0].mxu0
    %v185 = vpop.f32.mrb[0].mxu0
    %v186 = vadd.f32 0.0, %v185
    %v187 = vpop.f32.mrb[0].mxu0
    %188 = vmatprep.mubr.bf16.mxu0 0
    %189 = vmatmul.mubr.bf16.gmra.mrb[0].mxu0 %v77
    %v190 = vpop.f32.mrb[0].mxu0
    %v191 = vadd.f32 0.0, %v190
    %v192 = vpop.f32.mrb[0].mxu0
    %v193 = vpop.f32.mrb[0].mxu0
    %v194 = vadd.f32 0.0, %v193
    %v195 = vpop.f32.mrb[0].mxu0
    %196 = vmatprep.mubr.bf16.mxu0 0
    %197 = vmatmul.mubr.bf16.gmra.mrb[0].mxu0 %v78
    %v198 = vpop.f32.mrb[0].mxu0
    %v199 = vadd.f32 0.0, %v198
    %v200 = vpop.f32.mrb[0].mxu0
    %v201 = vpop.f32.mrb[0].mxu0
    %v202 = vadd.f32 0.0, %v201
    %v203 = vpop.f32.mrb[0].mxu0
    %204 = vmatprep.mubr.bf16.mxu0 0
    %205 = vmatmul.mubr.bf16.gmra.mrb[0].mxu0 %v79
    %v206 = vpop.f32.mrb[0].mxu0
    %v207 = vadd.f32 0.0, %v206
    %v208 = vpop.f32.mrb[0].mxu0
    %v209 = vpop.f32.mrb[0].mxu0
    %v210 = vadd.f32 0.0, %v209
    %v211 = vpop.f32.mrb[0].mxu0
    %212 = vmatprep.mubr.bf16.mxu0 0
    %213 = vmatmul.mubr.bf16.gmra.mrb[0].mxu0 %v80
    %v214 = vpop.f32.mrb[0].mxu0
    %v215 = vadd.f32 0.0, %v214
    %v216 = vpop.f32.mrb[0].mxu0
    %v217 = vpop.f32.mrb[0].mxu0
    %v218 = vadd.f32 0.0, %v217
    %v219 = vpop.f32.mrb[0].mxu0
    %220 = vmatprep.mubr.bf16.mxu0 0
    %221 = vmatmul.mubr.bf16.gmra.mrb[0].mxu0 %v81
    %v222 = vpop.f32.mrb[0].mxu0
    %v223 = vadd.f32 0.0, %v222
    %v224 = vpop.f32.mrb[0].mxu0
    %v225 = vpop.f32.mrb[0].mxu0
    %v226 = vadd.f32 0.0, %v225
    %v227 = vpop.f32.mrb[0].mxu0
    %228 = vmatprep.mubr.bf16.mxu0 0
    %229 = vmatmul.mubr.bf16.gmra.mrb[0].mxu0 %v82
    %v230 = vpop.f32.mrb[0].mxu0
    %v231 = vadd.f32 0.0, %v230
    %v232 = vpop.f32.mrb[0].mxu0
    %v233 = vpop.f32.mrb[0].mxu0
    %v234 = vadd.f32 0.0, %v233
    %v235 = vpop.f32.mrb[0].mxu0
    %236 = vmatprep.mubr.bf16.mxu0 0
    %237 = vmatmul.mubr.bf16.gmra.mrb[0].mxu0 %v83
    %v238 = vpop.f32.mrb[0].mxu0
    %v239 = vadd.f32 0.0, %v238
    %v240 = vpop.f32.mrb[0].mxu0
    %v241 = vpop.f32.mrb[0].mxu0
    %v242 = vadd.f32 0.0, %v241
    %v243 = vpop.f32.mrb[0].mxu0
    %244 = vdwg.mxu0
    %v245 = vpack.c.bf16 %v186, %v183
    %v246 = vpack.c.bf16 %v194, %v191
    %v247 = vpack.c.bf16 %v202, %v199
    %v248 = vpack.c.bf16 %v210, %v207
    %v249 = vpack.c.bf16 %v218, %v215
    %v250 = vpack.c.bf16 %v226, %v223
    %v251 = vpack.c.bf16 %v234, %v231
    %v252 = vpack.c.bf16 %v242, %v239
    %v261 = vunpack.c.l.b16 %v245
    %v262 = vunpack.c.h.b16 %v245
    %v263 = vunpack.c.l.b16 %v246
    %v264 = vunpack.c.h.b16 %v246
    %v265 = vunpack.c.l.b16 %v247
    %v266 = vunpack.c.h.b16 %v247
    %v267 = vunpack.c.l.b16 %v248
    %v268 = vunpack.c.h.b16 %v248
    %v269 = vunpack.c.l.b16 %v249
    %v270 = vunpack.c.h.b16 %v249
    %v271 = vunpack.c.l.b16 %v250
    %v272 = vunpack.c.h.b16 %v250
    %v273 = vunpack.c.l.b16 %v251
    %v274 = vunpack.c.h.b16 %v251
    %v275 = vunpack.c.l.b16 %v252
    %v276 = vunpack.c.h.b16 %v252
    %v277 = vpack.c.b16 %v261, %v261
    %v278 = vpack.c.b16 %v262, %v262
    %v279 = vpack.c.b16 %v263, %v263
    %v280 = vpack.c.b16 %v264, %v264
    %v281 = vpack.c.b16 %v265, %v265
    %v282 = vpack.c.b16 %v266, %v266
    %v283 = vpack.c.b16 %v267, %v267
    %v284 = vpack.c.b16 %v268, %v268
    %v285 = vpack.c.b16 %v269, %v269
    %v286 = vpack.c.b16 %v270, %v270
    %v287 = vpack.c.b16 %v271, %v271
    %v288 = vpack.c.b16 %v272, %v272
    %v289 = vpack.c.b16 %v273, %v273
    %v290 = vpack.c.b16 %v274, %v274
    %v291 = vpack.c.b16 %v275, %v275
    %v292 = vpack.c.b16 %v276, %v276
    %309 = vst [vmem:[#allocation8] sm:$0xf] %v277
    %310 = vst [vmem:[#allocation8 + $0x4] sm:$0xf] %v278
    %311 = vst [vmem:[#allocation8 + $0x8] sm:$0xf] %v279
    %312 = vst [vmem:[#allocation8 + $0xc] sm:$0xf] %v280
    %313 = vst [vmem:[#allocation8 + $0x10] sm:$0xf] %v281
    %314 = vst [vmem:[#allocation8 + $0x14] sm:$0xf] %v282
    %315 = vst [vmem:[#allocation8 + $0x18] sm:$0xf] %v283
    %316 = vst [vmem:[#allocation8 + $0x1c] sm:$0xf] %v284
    %317 = vst [vmem:[#allocation8 + $0x20] sm:$0xf] %v285
    %318 = vst [vmem:[#allocation8 + $0x24] sm:$0xf] %v286
    %319 = vst [vmem:[#allocation8 + $0x28] sm:$0xf] %v287
    %320 = vst [vmem:[#allocation8 + $0x2c] sm:$0xf] %v288
    %321 = vst [vmem:[#allocation8 + $0x30] sm:$0xf] %v289
    %322 = vst [vmem:[#allocation8 + $0x34] sm:$0xf] %v290
    %323 = vst [vmem:[#allocation8 + $0x38] sm:$0xf] %v291
    %324 = vst [vmem:[#allocation8 + $0x3c] sm:$0xf] %v292
    %v325 = vld [vmem:[#allocation7] sm:$0xff]
    %v326 = vld [vmem:[#allocation7 + $0x8] sm:$0xff]
    %v327 = vld [vmem:[#allocation7 + $0x10] sm:$0xff]
    %v328 = vld [vmem:[#allocation7 + $0x18] sm:$0xff]
    %v329 = vld [vmem:[#allocation7 + $0x20] sm:$0xff]
    %v330 = vld [vmem:[#allocation7 + $0x28] sm:$0xff]
    %v331 = vld [vmem:[#allocation7 + $0x30] sm:$0xff]
    %v332 = vld [vmem:[#allocation7 + $0x38] sm:$0xff]
    %v333 = vld [vmem:[#allocation7 + $0x40] sm:$0xff]
    %v334 = vld [vmem:[#allocation7 + $0x48] sm:$0xff]
    %v335 = vld [vmem:[#allocation7 + $0x50] sm:$0xff]
    %v336 = vld [vmem:[#allocation7 + $0x58] sm:$0xff]
    %v337 = vld [vmem:[#allocation7 + $0x60] sm:$0xff]
    %v338 = vld [vmem:[#allocation7 + $0x68] sm:$0xff]
    %v339 = vld [vmem:[#allocation7 + $0x70] sm:$0xff]
    %v340 = vld [vmem:[#allocation7 + $0x78] sm:$0xff]
    %341 = vmatprep.subr.mxu0 0.0
    %342 = vmatpush1.msra.mxu0 %v325
    %343 = vmatprep.subr.mxu0 0.0
    %344 = vmatpush1.msra.mxu0 %v326
    %345 = vmatprep.subr.mxu0 0.0
    %346 = vmatpush1.msra.mxu0 %v327
    %347 = vmatprep.subr.mxu0 0.0
    %348 = vmatpush1.msra.mxu0 %v328
    %349 = vmatprep.subr.mxu0 0.0
    %350 = vmatpush1.msra.mxu0 %v329
    %351 = vmatprep.subr.mxu0 0.0
    %352 = vmatpush1.msra.mxu0 %v330
    %353 = vmatprep.subr.mxu0 0.0
    %354 = vmatpush1.msra.mxu0 %v331
    %355 = vmatprep.subr.mxu0 0.0
    %356 = vmatpush1.msra.mxu0 %v332
    %357 = vmatprep.subr.mxu0 0.0
    %358 = vmatpush1.msra.mxu0 %v333
    %359 = vmatprep.subr.mxu0 0.0
    %360 = vmatpush1.msra.mxu0 %v334
    %361 = vmatprep.subr.mxu0 0.0
    %362 = vmatpush1.msra.mxu0 %v335
    %363 = vmatprep.subr.mxu0 0.0
    %364 = vmatpush1.msra.mxu0 %v336
    %365 = vmatprep.subr.mxu0 0.0
    %366 = vmatpush1.msra.mxu0 %v337
    %367 = vmatprep.subr.mxu0 0.0
    %368 = vmatpush1.msra.mxu0 %v338
    %369 = vmatprep.subr.mxu0 0.0
    %370 = vmatpush1.msra.mxu0 %v339
    %371 = vmatprep.subr.mxu0 0.0
    %372 = vmatpush1.msra.mxu0 %v340
    %373 = vmatprep.subr.mxu0 0.0
    %374 = vmatpush1.msra.mxu0 0.0
    %375 = vmatprep.subr.mxu0 0.0
    %376 = vmatpush1.msra.mxu0 0.0
    %377 = vmatprep.subr.mxu0 0.0
    %378 = vmatpush1.msra.mxu0 0.0
    %379 = vmatprep.subr.mxu0 0.0
    %380 = vmatpush1.msra.mxu0 0.0
    %381 = vmatprep.subr.mxu0 0.0
    %382 = vmatpush1.msra.mxu0 0.0
    %383 = vmatprep.subr.mxu0 0.0
    %384 = vmatpush1.msra.mxu0 0.0
    %385 = vmatprep.subr.mxu0 0.0
    %386 = vmatpush1.msra.mxu0 0.0
    %387 = vmatprep.subr.mxu0 0.0
    %388 = vmatpush1.msra.mxu0 0.0
    %389 = vmatprep.subr.mxu0 0.0
    %390 = vmatpush1.msra.mxu0 0.0
    %391 = vmatprep.subr.mxu0 0.0
    %392 = vmatpush1.msra.mxu0 0.0
    %393 = vmatprep.subr.mxu0 0.0
    %394 = vmatpush1.msra.mxu0 0.0
    %395 = vmatprep.subr.mxu0 0.0
    %396 = vmatpush1.msra.mxu0 0.0
    %397 = vmatprep.subr.mxu0 0.0
    %398 = vmatpush1.msra.mxu0 0.0
    %399 = vmatprep.subr.mxu0 0.0
    %400 = vmatpush1.msra.mxu0 0.0
    %401 = vmatprep.subr.mxu0 0.0
    %402 = vmatpush1.msra.mxu0 0.0
    %403 = vmatprep.subr.mxu0 0.0
    %404 = vmatpush1.msra.mxu0 0.0
    %405 = vmatprep.mubr.f32.mxu0 0.0
    %406 = vmatmul.mubr.f32.gmra.mrb[0].mxu0 %v183
    %v407 = vpop.f32.mrb[0].mxu0
    %v408 = vadd.f32 0.0, %v407
    %v409 = vpop.f32.mrb[0].mxu0
    %410 = vmatprep.mubr.f32.mxu0 0.0
    %411 = vmatmul.mubr.f32.gmra.mrb[0].mxu0 %v186
    %v412 = vpop.f32.mrb[0].mxu0
    %v413 = vadd.f32 0.0, %v412
    %v414 = vpop.f32.mrb[0].mxu0
    %415 = vmatprep.mubr.f32.mxu0 0.0
    %416 = vmatmul.mubr.f32.gmra.mrb[0].mxu0 %v191
    %v417 = vpop.f32.mrb[0].mxu0
    %v418 = vadd.f32 0.0, %v417
    %v419 = vpop.f32.mrb[0].mxu0
    %420 = vmatprep.mubr.f32.mxu0 0.0
    %421 = vmatmul.mubr.f32.gmra.mrb[0].mxu0 %v194
    %v422 = vpop.f32.mrb[0].mxu0
    %v423 = vadd.f32 0.0, %v422
    %v424 = vpop.f32.mrb[0].mxu0
    %425 = vmatprep.mubr.f32.mxu0 0.0
    %426 = vmatmul.mubr.f32.gmra.mrb[0].mxu0 %v199
    %v427 = vpop.f32.mrb[0].mxu0
    %v428 = vadd.f32 0.0, %v427
    %v429 = vpop.f32.mrb[0].mxu0
    %430 = vmatprep.mubr.f32.mxu0 0.0
    %431 = vmatmul.mubr.f32.gmra.mrb[0].mxu0 %v202
    %v432 = vpop.f32.mrb[0].mxu0
    %v433 = vadd.f32 0.0, %v432
    %v434 = vpop.f32.mrb[0].mxu0
    %435 = vmatprep.mubr.f32.mxu0 0.0
    %436 = vmatmul.mubr.f32.gmra.mrb[0].mxu0 %v207
    %v437 = vpop.f32.mrb[0].mxu0
    %v438 = vadd.f32 0.0, %v437
    %v439 = vpop.f32.mrb[0].mxu0
    %440 = vmatprep.mubr.f32.mxu0 0.0
    %441 = vmatmul.mubr.f32.gmra.mrb[0].mxu0 %v210
    %v442 = vpop.f32.mrb[0].mxu0
    %v443 = vadd.f32 0.0, %v442
    %v444 = vpop.f32.mrb[0].mxu0
    %445 = vmatprep.mubr.f32.mxu0 0.0
    %446 = vmatmul.mubr.f32.gmra.mrb[0].mxu0 %v215
    %v447 = vpop.f32.mrb[0].mxu0
    %v448 = vadd.f32 0.0, %v447
    %v449 = vpop.f32.mrb[0].mxu0
    %450 = vmatprep.mubr.f32.mxu0 0.0
    %451 = vmatmul.mubr.f32.gmra.mrb[0].mxu0 %v218
    %v452 = vpop.f32.mrb[0].mxu0
    %v453 = vadd.f32 0.0, %v452
    %v454 = vpop.f32.mrb[0].mxu0
    %455 = vmatprep.mubr.f32.mxu0 0.0
    %456 = vmatmul.mubr.f32.gmra.mrb[0].mxu0 %v223
    %v457 = vpop.f32.mrb[0].mxu0
    %v458 = vadd.f32 0.0, %v457
    %v459 = vpop.f32.mrb[0].mxu0
    %460 = vmatprep.mubr.f32.mxu0 0.0
    %461 = vmatmul.mubr.f32.gmra.mrb[0].mxu0 %v226
    %v462 = vpop.f32.mrb[0].mxu0
    %v463 = vadd.f32 0.0, %v462
    %v464 = vpop.f32.mrb[0].mxu0
    %465 = vmatprep.mubr.f32.mxu0 0.0
    %466 = vmatmul.mubr.f32.gmra.mrb[0].mxu0 %v231
    %v467 = vpop.f32.mrb[0].mxu0
    %v468 = vadd.f32 0.0, %v467
    %v469 = vpop.f32.mrb[0].mxu0
    %470 = vmatprep.mubr.f32.mxu0 0.0
    %471 = vmatmul.mubr.f32.gmra.mrb[0].mxu0 %v234
    %v472 = vpop.f32.mrb[0].mxu0
    %v473 = vadd.f32 0.0, %v472
    %v474 = vpop.f32.mrb[0].mxu0
    %475 = vmatprep.mubr.f32.mxu0 0.0
    %476 = vmatmul.mubr.f32.gmra.mrb[0].mxu0 %v239
    %v477 = vpop.f32.mrb[0].mxu0
    %v478 = vadd.f32 0.0, %v477
    %v479 = vpop.f32.mrb[0].mxu0
    %480 = vmatprep.mubr.f32.mxu0 0.0
    %481 = vmatmul.mubr.f32.gmra.mrb[0].mxu0 %v242
    %v482 = vpop.f32.mrb[0].mxu0
    %v483 = vadd.f32 0.0, %v482
    %v484 = vpop.f32.mrb[0].mxu0
    %485 = vdwg.mxu0
    %486 = vst [vmem:[#allocation9] sm:$0xff] %v408
    %487 = vst [vmem:[#allocation9 + $0x8] sm:$0xff] %v413
    %488 = vst [vmem:[#allocation9 + $0x10] sm:$0xff] %v418
    %489 = vst [vmem:[#allocation9 + $0x18] sm:$0xff] %v423
    %490 = vst [vmem:[#allocation9 + $0x20] sm:$0xff] %v428
    %491 = vst [vmem:[#allocation9 + $0x28] sm:$0xff] %v433
    %492 = vst [vmem:[#allocation9 + $0x30] sm:$0xff] %v438
    %493 = vst [vmem:[#allocation9 + $0x38] sm:$0xff] %v443
    %494 = vst [vmem:[#allocation9 + $0x40] sm:$0xff] %v448
    %495 = vst [vmem:[#allocation9 + $0x48] sm:$0xff] %v453
    %496 = vst [vmem:[#allocation9 + $0x50] sm:$0xff] %v458
    %497 = vst [vmem:[#allocation9 + $0x58] sm:$0xff] %v463
    %498 = vst [vmem:[#allocation9 + $0x60] sm:$0xff] %v468
    %499 = vst [vmem:[#allocation9 + $0x68] sm:$0xff] %v473
    %500 = vst [vmem:[#allocation9 + $0x70] sm:$0xff] %v478
    %501 = vst [vmem:[#allocation9 + $0x78] sm:$0xff] %v483
    // Predicated region
    $region26: #{tpu_custom_call.1} parent=1 // pred_check
      _
    $region27: #{tpu_custom_call.1} parent=1 // pred_check_branch
      %503 = sbr.rel (0) target = $region29
    $region28: #{tpu_custom_call.1} parent=1 // pred_region
      %s505 = ssub.s32 1024, 1024
      %506 = vsyncadd [#allocation4], %s505
      %s507 = sshll.u32 [#allocation8], 4
      %s508 = int_to_ptr.vmem [resolvable:$true] %s507
      %513 = dma.vmem_to_hbm [thread:$0]  %s508, 1024, %s3, [#allocation4], 64, 64, 4
    $region29: #{tpu_custom_call.1} parent=1 // pred_fallthru
      _
    // Predicated region
    $region30: #{tpu_custom_call.1} parent=1 // pred_check
      _
    $region31: #{tpu_custom_call.1} parent=1 // pred_check_branch
      %515 = sbr.rel (0) target = $region33
    $region32: #{tpu_custom_call.1} parent=1 // pred_region
      %s517 = ssub.s32 2048, 2048
      %518 = vsyncadd [#allocation10], %s517
      %s519 = sshll.u32 [#allocation9], 4
      %s520 = int_to_ptr.vmem [resolvable:$true] %s519
      %525 = dma.vmem_to_hbm [thread:$0]  %s520, 2048, %s4, [#allocation10], 128, 128, 8
    $region33: #{tpu_custom_call.1} parent=1 // pred_fallthru
      _
    // Predicated region
    $region34: #{tpu_custom_call.1} parent=1 // pred_check
      _
    $region35: #{tpu_custom_call.1} parent=1 // pred_check_branch
      %527 = sbr.rel (0) target = $region37
    $region36: #{tpu_custom_call.1} parent=1 // pred_region
      %528 = dma.done [#allocation4], 1024
    $region37: #{tpu_custom_call.1} parent=1 // pred_fallthru
      _
    // Predicated region
    $region38: #{tpu_custom_call.1} parent=1 // pred_check
      _
    $region39: #{tpu_custom_call.1} parent=1 // pred_check_branch
      %530 = sbr.rel (0) target = $region41
    $region40: #{tpu_custom_call.1} parent=1 // pred_region
      %531 = dma.done [#allocation10], 2048
    $region41: #{tpu_custom_call.1} parent=1 // pred_fallthru
      _
    %532 = vsyncpa [#allocation3], 1
    %533 = vsyncpa [#allocation6], 1
    %534 = vsyncpa [#allocation4], 1
    %535 = vsyncpa [#allocation10], 1

</llo_original>
